<compile_context>
chip_gen: v5e
topology: v5e:2x2
jax: 0.10.0
libtpu: 0.0.40
codegen_flags: <defaults>
</compile_context>

<pallas_src>
import jax
import jax.numpy as jnp
from jax.experimental import pallas as pl
from jax.experimental.pallas import tpu as pltpu

_MAX_CHUNKS = 4  # DMA descriptors kept in flight for the explicit-copy path.


def baselinegrid_forward(pts):
    """Forward pass of Baselinegrid: identity.

    Zero data movement is the optimum for an identity, so return the input
    directly instead of launching a copy kernel.  (This is also what an
    `input_output_aliases`-style donated copy would reduce to.)
    """
    return pts


def _make_dma_copy_kernel(chunks):
    """Build a kernel copying static (row_start, rows) chunks HBM->HBM."""

    def kernel(x_hbm, o_hbm, sems):
        copies = []
        # Issue every chunk first so all descriptors are in flight ...
        for idx, (start, rows) in enumerate(chunks):
            cp = pltpu.make_async_copy(
                x_hbm.at[pl.ds(start, rows)],
                o_hbm.at[pl.ds(start, rows)],
                sems.at[idx],
            )
            cp.start()
            copies.append(cp)
        # ... then wait for all of them.
        for cp in copies:
            cp.wait()

    return kernel


def baselinegrid_forward_pallas(pts, *, max_chunks=_MAX_CHUNKS,
                                min_chunk_bytes=1 << 20):
    """Identity copied into a fresh buffer via chunked HBM->HBM DMA.

    No padding, no post-slice, no VMEM usage: chunk boundaries are exact
    static row counts along the leading axis, so ragged sizes cost exactly
    one HBM read + one HBM write.
    """
    if pts.size == 0:
        return pts

    x = pts if pts.ndim >= 1 else pts.reshape(1)
    lead = x.shape[0]
    itemsize = jnp.dtype(x.dtype).itemsize
    total_bytes = x.size * itemsize

    # A handful of roughly equal chunks (static Python ints).  Small inputs
    # collapse to a single whole-array DMA.
    n_chunks = max(1, min(max_chunks, lead,
                          pl.cdiv(total_bytes, max(1, min_chunk_bytes))))
    rows_per_chunk = pl.cdiv(lead, n_chunks)
    if lead > 8:
        # Keep chunk starts on 8-row boundaries (friendlier DMA offsets).
        rows_per_chunk = pl.cdiv(rows_per_chunk, 8) * 8

    chunks = []
    start = 0
    while start < lead:
        rows = min(rows_per_chunk, lead - start)
        chunks.append((start, rows))
        start += rows

    kernel = _make_dma_copy_kernel(chunks)

    out = pl.pallas_call(
        kernel,
        out_shape=jax.ShapeDtypeStruct(x.shape, x.dtype),
        in_specs=[pl.BlockSpec(memory_space=pl.ANY)],
        out_specs=pl.BlockSpec(memory_space=pl.ANY),
        scratch_shapes=[pltpu.SemaphoreType.DMA((len(chunks),))],
        # Accurate advisory: exactly one read + one write of the array.
        cost_estimate=pl.CostEstimate(
            flops=0,
            transcendentals=0,
            bytes_accessed=2 * total_bytes,
        ),
    )(x)

    return out if pts.ndim >= 1 else out.reshape(pts.shape)


if __name__ == "__main__":
    key = jax.random.PRNGKey(0)
    k1, k2, k3 = jax.random.split(key, 3)

    # Small 2D point cloud: 256 points with (x, y) coordinates in [0, 1).
    pts = jax.random.uniform(k1, (256, 2), dtype=jnp.float32)

    # Module-faithful forward: identity with zero data movement.
    out = jax.block_until_ready(baselinegrid_forward(pts))
    assert out.shape == pts.shape and out.dtype == pts.dtype
    assert bool(jnp.array_equal(out, pts))

    # Explicit Pallas copy (single whole-array HBM->HBM DMA).
    out_k = jax.block_until_ready(baselinegrid_forward_pallas(pts))
    assert out_k.shape == pts.shape and out_k.dtype == pts.dtype
    assert bool(jnp.array_equal(out_k, pts))

    # Ragged point count: multiple DMA chunks in flight, no pad / no slice.
    pts2 = jax.random.uniform(k2, (4099, 2), dtype=jnp.float32)
    out2 = jax.block_until_ready(
        baselinegrid_forward_pallas(pts2, min_chunk_bytes=4096))
    assert out2.shape == pts2.shape and out2.dtype == pts2.dtype
    assert bool(jnp.array_equal(out2, pts2))

    # Different dtype through the same DMA path (no layout/tiling concerns,
    # since nothing ever lands in VMEM).
    pts3 = jax.random.uniform(k3, (1024, 2), dtype=jnp.float32).astype(jnp.bfloat16)
    out3 = jax.block_until_ready(
        baselinegrid_forward_pallas(pts3, min_chunk_bytes=1024))
    assert out3.shape == pts3.shape and out3.dtype == pts3.dtype
    assert bool(jnp.array_equal(out3, pts3))

    print("KERNEL_OK")
</pallas_src>

<mosaic_0001>
module attributes {stable_mosaic.version = 11 : i64} {
  func.func @kernel(%arg0: memref<256x2xf32, #tpu.memory_space<any>>, %arg1: memref<256x2xf32, #tpu.memory_space<any>>, %arg2: memref<1x!tpu.dma_semaphore, #tpu.memory_space<semaphore_mem>>) attributes {dimension_semantics = [], scalar_prefetch = 0 : i64, scratch_operands = 1 : i64, tpu.core_type = #tpu.core_type<tc>} {
    %c0_i32 = arith.constant 0 : i32
    %c0_i32_0 = arith.constant 0 : i32
    %c0_i32_1 = arith.constant 0 : i32
    %0 = tpu.memref_slice %arg0[%c0_i32_0, %c0_i32_1] : memref<256x2xf32, #tpu.memory_space<any>> -> memref<256x2xf32, #tpu.memory_space<any>>
    %c0_i32_2 = arith.constant 0 : i32
    %c0_i32_3 = arith.constant 0 : i32
    %1 = tpu.memref_slice %arg1[%c0_i32_2, %c0_i32_3] : memref<256x2xf32, #tpu.memory_space<any>> -> memref<256x2xf32, #tpu.memory_space<any>>
    %2 = tpu.memref_slice %arg2[%c0_i32] : memref<1x!tpu.dma_semaphore, #tpu.memory_space<semaphore_mem>> -> memref<1x!tpu.dma_semaphore, #tpu.memory_space<semaphore_mem>>
    %3 = tpu.memref_squeeze %2 : memref<1x!tpu.dma_semaphore, #tpu.memory_space<semaphore_mem>> -> memref<!tpu.dma_semaphore, #tpu.memory_space<semaphore_mem>>
    tpu.enqueue_dma source(%0 : memref<256x2xf32, #tpu.memory_space<any>>) target(%1 : memref<256x2xf32, #tpu.memory_space<any>>) target_semaphore(%3 : memref<!tpu.dma_semaphore, #tpu.memory_space<semaphore_mem>>)
    %c0_i32_4 = arith.constant 0 : i32
    %c0_i32_5 = arith.constant 0 : i32
    %c0_i32_6 = arith.constant 0 : i32
    %4 = tpu.memref_slice %arg0[%c0_i32_5, %c0_i32_6] : memref<256x2xf32, #tpu.memory_space<any>> -> memref<256x2xf32, #tpu.memory_space<any>>
    %c0_i32_7 = arith.constant 0 : i32
    %c0_i32_8 = arith.constant 0 : i32
    %5 = tpu.memref_slice %arg1[%c0_i32_7, %c0_i32_8] : memref<256x2xf32, #tpu.memory_space<any>> -> memref<256x2xf32, #tpu.memory_space<any>>
    %6 = tpu.memref_slice %arg2[%c0_i32_4] : memref<1x!tpu.dma_semaphore, #tpu.memory_space<semaphore_mem>> -> memref<1x!tpu.dma_semaphore, #tpu.memory_space<semaphore_mem>>
    %7 = tpu.memref_squeeze %6 : memref<1x!tpu.dma_semaphore, #tpu.memory_space<semaphore_mem>> -> memref<!tpu.dma_semaphore, #tpu.memory_space<semaphore_mem>>
    tpu.wait_dma2 semaphore(%7 : memref<!tpu.dma_semaphore, #tpu.memory_space<semaphore_mem>>) src(%4 : memref<256x2xf32, #tpu.memory_space<any>>) dst(%5 : memref<256x2xf32, #tpu.memory_space<any>>)
    return
  }
}

</mosaic_0001>

<llo_original>
// kernel: tpu_custom_call.1
$region0: #{tpu_custom_call.1}
  #allocation0 [shape = 'u32[]', space=smem, size = 0x4, offset = 0x4, fixed_abs, tag = 'smem constant byte address 0x4 - core index']
  #allocation1 [shape = 'u32[72,128]{1,0:T(1,128)}', space=vmem, size = 0x9000, scoped, tag = 'internal scratch']
  #allocation2 [shape = 's32[1]{0}', space=sflag, size = 0x4, scoped, tag = 'scratch operand']
  #allocation3 [shape = 's32[]', space=sflag, size = 0x4, offset = 0, fixed_abs, tag = 'sflag constant byte address 0x0 - dummy sync flag']
  %s0 = inlined_call_operand.vmem [shape: f32[256,2], index: 0, kind: input, shape index: {}]
  %s1 = inlined_call_operand.vmem [shape: f32[256,2], index: 1, kind: output, shape index: {}]
  %s2 = sld [smem:[#allocation0]]
  $region21: #{tpu_custom_call.1} parent=0
    _
  %s4 = ssub.s32 1, %s2
  %s5 = scalar_select 0, %s4, %s2
  // Predicated region
  $region2: #{tpu_custom_call.1} parent=0 // pred_check
    _
  $region3: #{tpu_custom_call.1} parent=0 // pred_check_branch
    %7 = sbr.rel (0) target = $region5
  $region4: #{tpu_custom_call.1} parent=0 // pred_region
    loop: start=0, step=1, limit=1
    $region6: #{tpu_custom_call.1} parent=4 // loop_pre_header
      _
    $region7: #{tpu_custom_call.1} parent=4 // loop_header
      %s9 = sphi 0, %s13
      %p10 = scmp.ge.s32.totalorder %s9, 1
      %s14 = sphi %s0, %s0
      %s15 = sphi %s1, %s1
    $region8: #{tpu_custom_call.1} parent=4 // loop_header_branch
      %12 = sbr.rel (%p10) target = $region12
    $region9: #{tpu_custom_call.1} parent=4 // loop_body
      %v16 = vld [vmem:[%s14] sm:$0xff]
      %17 = vst [vmem:[%s15] sm:$0xff] %v16
      %v18 = vld [vmem:[%s14 + $0x8] sm:$0xff]
      %19 = vst [vmem:[%s15 + $0x8] sm:$0xff] %v18
      %v20 = vld [vmem:[%s14 + $0x10] sm:$0xff]
      %21 = vst [vmem:[%s15 + $0x10] sm:$0xff] %v20
      %v22 = vld [vmem:[%s14 + $0x18] sm:$0xff]
      %23 = vst [vmem:[%s15 + $0x18] sm:$0xff] %v22
      %v24 = vld [vmem:[%s14 + $0x20] sm:$0xff]
      %25 = vst [vmem:[%s15 + $0x20] sm:$0xff] %v24
      %v26 = vld [vmem:[%s14 + $0x28] sm:$0xff]
      %27 = vst [vmem:[%s15 + $0x28] sm:$0xff] %v26
      %v28 = vld [vmem:[%s14 + $0x30] sm:$0xff]
      %29 = vst [vmem:[%s15 + $0x30] sm:$0xff] %v28
      %v30 = vld [vmem:[%s14 + $0x38] sm:$0xff]
      %31 = vst [vmem:[%s15 + $0x38] sm:$0xff] %v30
      %v32 = vld [vmem:[%s14 + $0x40] sm:$0xff]
      %33 = vst [vmem:[%s15 + $0x40] sm:$0xff] %v32
      %v34 = vld [vmem:[%s14 + $0x48] sm:$0xff]
      %35 = vst [vmem:[%s15 + $0x48] sm:$0xff] %v34
      %v36 = vld [vmem:[%s14 + $0x50] sm:$0xff]
      %37 = vst [vmem:[%s15 + $0x50] sm:$0xff] %v36
      %v38 = vld [vmem:[%s14 + $0x58] sm:$0xff]
      %39 = vst [vmem:[%s15 + $0x58] sm:$0xff] %v38
      %v40 = vld [vmem:[%s14 + $0x60] sm:$0xff]
      %41 = vst [vmem:[%s15 + $0x60] sm:$0xff] %v40
      %v42 = vld [vmem:[%s14 + $0x68] sm:$0xff]
      %43 = vst [vmem:[%s15 + $0x68] sm:$0xff] %v42
      %v44 = vld [vmem:[%s14 + $0x70] sm:$0xff]
      %45 = vst [vmem:[%s15 + $0x70] sm:$0xff] %v44
      %v46 = vld [vmem:[%s14 + $0x78] sm:$0xff]
      %47 = vst [vmem:[%s15 + $0x78] sm:$0xff] %v46
      %v48 = vld [vmem:[%s14 + $0x80] sm:$0xff]
      %49 = vst [vmem:[%s15 + $0x80] sm:$0xff] %v48
      %v50 = vld [vmem:[%s14 + $0x88] sm:$0xff]
      %51 = vst [vmem:[%s15 + $0x88] sm:$0xff] %v50
      %v52 = vld [vmem:[%s14 + $0x90] sm:$0xff]
      %53 = vst [vmem:[%s15 + $0x90] sm:$0xff] %v52
      %v54 = vld [vmem:[%s14 + $0x98] sm:$0xff]
      %55 = vst [vmem:[%s15 + $0x98] sm:$0xff] %v54
      %v56 = vld [vmem:[%s14 + $0xa0] sm:$0xff]
      %57 = vst [vmem:[%s15 + $0xa0] sm:$0xff] %v56
      %v58 = vld [vmem:[%s14 + $0xa8] sm:$0xff]
      %59 = vst [vmem:[%s15 + $0xa8] sm:$0xff] %v58
      %v60 = vld [vmem:[%s14 + $0xb0] sm:$0xff]
      %61 = vst [vmem:[%s15 + $0xb0] sm:$0xff] %v60
      %v62 = vld [vmem:[%s14 + $0xb8] sm:$0xff]
      %63 = vst [vmem:[%s15 + $0xb8] sm:$0xff] %v62
      %v64 = vld [vmem:[%s14 + $0xc0] sm:$0xff]
      %65 = vst [vmem:[%s15 + $0xc0] sm:$0xff] %v64
      %v66 = vld [vmem:[%s14 + $0xc8] sm:$0xff]
      %67 = vst [vmem:[%s15 + $0xc8] sm:$0xff] %v66
      %v68 = vld [vmem:[%s14 + $0xd0] sm:$0xff]
      %69 = vst [vmem:[%s15 + $0xd0] sm:$0xff] %v68
      %v70 = vld [vmem:[%s14 + $0xd8] sm:$0xff]
      %71 = vst [vmem:[%s15 + $0xd8] sm:$0xff] %v70
      %v72 = vld [vmem:[%s14 + $0xe0] sm:$0xff]
      %73 = vst [vmem:[%s15 + $0xe0] sm:$0xff] %v72
      %v74 = vld [vmem:[%s14 + $0xe8] sm:$0xff]
      %75 = vst [vmem:[%s15 + $0xe8] sm:$0xff] %v74
      %v76 = vld [vmem:[%s14 + $0xf0] sm:$0xff]
      %77 = vst [vmem:[%s15 + $0xf0] sm:$0xff] %v76
      %v78 = vld [vmem:[%s14 + $0xf8] sm:$0xff]
      %79 = vst [vmem:[%s15 + $0xf8] sm:$0xff] %v78
    $region10: #{tpu_custom_call.1} parent=4 // loop_footer
      %s13 = sadd.s32 1, %s9
    $region11: #{tpu_custom_call.1} parent=4 // loop_footer_branch
      %8 = sbr.rel target = $region7
    $region12: #{tpu_custom_call.1} parent=4 // loop_exit
      _
  $region5: #{tpu_custom_call.1} parent=0 // pred_fallthru
    _
  // Predicated region
  $region13: #{tpu_custom_call.1} parent=0 // pred_check
    _
  $region14: #{tpu_custom_call.1} parent=0 // pred_check_branch
    %81 = sbr.rel target = $region16
  $region15: #{tpu_custom_call.1} parent=0 // pred_region
    _
  $region16: #{tpu_custom_call.1} parent=0 // pred_fallthru
    _
  // Predicated region
  $region17: #{tpu_custom_call.1} parent=0 // pred_check
    _
  $region18: #{tpu_custom_call.1} parent=0 // pred_check_branch
    %84 = sbr.rel (0) target = $region20
  $region19: #{tpu_custom_call.1} parent=0 // pred_region
    %85 = vsyncadd [#allocation2], 4096
  $region20: #{tpu_custom_call.1} parent=0 // pred_fallthru
    _
  %s86 = smul.u32 256, 1
  %s87 = sshll.u32 %s86, 4
  %88 = dma.done [#allocation2], %s87
  %89 = vsyncmov [#allocation2]
  %s90 = vpop.sfrf %89
  %p91 = scmp.eq.s32.totalorder %s90, 0
  %p92 = pneg %p91
  %94 = shalt.err (%p92)

</llo_original>
